<compile_context>
chip_gen: v6e
topology: v6e:2x2x1
jax: 0.10.0
libtpu: 0.0.40
codegen_flags: <defaults>
</compile_context>

<pallas_src>
from functools import partial

import numpy as np
import jax
import jax.numpy as jnp
from jax.experimental import pallas as pl
from jax.experimental.pallas import tpu as pltpu

_LANE = 128
_SUBLANE = 8


def _round_up(n, m):
    return (n + m - 1) // m * m


def _cdiv(a, b):
    return (a + b - 1) // b


def mlp_layer_sizes(input_dim, output_dim, nlayers=2, midmult=1.0):
    """Replicates build_mlp's mlp_layers() size schedule."""
    midlayersize = midmult * ((input_dim + output_dim) // 2)
    midlayersize = max(midlayersize, 1)
    nlayers += 2
    layers1 = np.around(
        np.logspace(np.log10(input_dim), np.log10(midlayersize), num=nlayers // 2)
    ).astype(int)
    layers2 = np.around(
        np.logspace(np.log10(midlayersize), np.log10(output_dim), num=(nlayers + 1) // 2)
    ).astype(int)[1:]
    return list(np.concatenate([layers1, layers2]))


def encoder_kernel(x_ref, w1_ref, b1_ref, g_ref, beta_ref, w2_ref, b2_ref, o_ref,
                   *, mid_true):
    # --- Linear 1 on the MXU: bf16 operands, f32 accumulation ---
    # x tile: (TB, dim) f32; w1 columns >= mid_true are zero, so pad lanes of h == b1_pad == 0.
    h = jnp.dot(x_ref[...].astype(jnp.bfloat16), w1_ref[...],
                preferred_element_type=jnp.float32) + b1_ref[...]

    # --- LayerNorm over the TRUE mid features (pad lanes of h are exactly 0) ---
    mid_pad = h.shape[-1]
    lane_id = jax.lax.broadcasted_iota(jnp.int32, (1, mid_pad), 1)
    mask = (lane_id < mid_true).astype(jnp.float32)
    inv_n = 1.0 / float(mid_true)
    mu = jnp.sum(h, axis=-1, keepdims=True) * inv_n          # pad lanes contribute 0
    centered = (h - mu) * mask                                # exclude pad lanes
    var = jnp.sum(centered * centered, axis=-1, keepdims=True) * inv_n
    # gamma/beta are zero on pad lanes -> LN output pad lanes are exactly 0.
    h = (h - mu) * jax.lax.rsqrt(var + 1e-5) * g_ref[...] + beta_ref[...]

    # --- Mish with a single EUP transcendental ---
    # h * tanh(softplus(h)) == h * e*(2+e) / ((1+e)^2 + 1),  e = exp(h)
    # Clamp at 20: for h >= 20 the factor is 1.0 to f32 precision (avoids overflow).
    # Numerator e*(2+e) avoids the (1+e)^2 - 1 cancellation for very negative h.
    e = jnp.exp(jnp.minimum(h, 20.0))
    one_plus_e = 1.0 + e
    numer = e * (2.0 + e)
    denom = one_plus_e * one_plus_e + 1.0
    h = h * numer * pl.reciprocal(denom, approx=True)         # mish(0) == 0 -> pads stay 0

    # --- Linear 2 on the MXU (w2 pad rows are zero) ---
    z = jnp.dot(h.astype(jnp.bfloat16), w2_ref[...],
                preferred_element_type=jnp.float32) + b2_ref[...]
    o_ref[...] = z.astype(o_ref.dtype)


def prepare_padded_params(params):
    """Build padded / bf16 parameters ONCE (hoisted out of the per-call path)."""
    w1, b1, gamma, beta, w2, b2 = params
    d_in, d_mid = w1.shape
    d_out = w2.shape[1]
    mid_p = _round_up(d_mid, _LANE)   # only the intermediate (VMEM-resident) dim is padded
    w1_p = jnp.zeros((d_in, mid_p), jnp.bfloat16).at[:, :d_mid].set(w1.astype(jnp.bfloat16))
    b1_p = jnp.zeros((1, mid_p), jnp.float32).at[:, :d_mid].set(b1)
    g_p = jnp.zeros((1, mid_p), jnp.float32).at[:, :d_mid].set(gamma)
    be_p = jnp.zeros((1, mid_p), jnp.float32).at[:, :d_mid].set(beta)
    w2_p = jnp.zeros((mid_p, d_out), jnp.bfloat16).at[:d_mid, :].set(w2.astype(jnp.bfloat16))
    b2_p = b2.astype(jnp.float32).reshape(1, d_out)
    return (w1_p, b1_p, g_p, be_p, w2_p, b2_p), (d_in, d_mid, d_out)


def encoder_forward(x, padded_params, dims, n_agents, *, block_b=1024):
    """x: (B * n_agents, d) float32.  Returns z: (B, hidden_dim) float32."""
    w1_p, b1_p, g_p, be_p, w2_p, b2_p = padded_params
    d_in, d_mid, d_out = dims
    mid_p = w1_p.shape[1]

    B = x.shape[0] // n_agents
    x2 = x.reshape(B, -1)                            # (B, n_agents * d) == (B, dim)
    assert x2.shape[1] == d_in, "dim must equal n_agents * per-agent feature dim"

    # Batch tile: multiple of 8, capped at block_b, and aimed at >=2 grid steps so the
    # "parallel" batch axis can shard across both TensorCores on v7x.
    tb = min(block_b, _round_up(_cdiv(B, 2), _SUBLANE))
    tb = max(tb, _SUBLANE)
    grid = (_cdiv(B, tb),)                           # ragged last block handled by Pallas

    kernel = partial(encoder_kernel, mid_true=d_mid)

    z = pl.pallas_call(
        kernel,
        out_shape=jax.ShapeDtypeStruct((B, d_out), jnp.float32),
        grid=grid,
        in_specs=[
            pl.BlockSpec((tb, d_in), lambda i: (i, 0)),       # x tile, unpadded, pipelined
            pl.BlockSpec((d_in, mid_p), lambda i: (0, 0)),    # VMEM-resident weights
            pl.BlockSpec((1, mid_p), lambda i: (0, 0)),
            pl.BlockSpec((1, mid_p), lambda i: (0, 0)),
            pl.BlockSpec((1, mid_p), lambda i: (0, 0)),
            pl.BlockSpec((mid_p, d_out), lambda i: (0, 0)),
            pl.BlockSpec((1, d_out), lambda i: (0, 0)),
        ],
        out_specs=pl.BlockSpec((tb, d_out), lambda i: (i, 0)),  # exact width: no slice pass
        compiler_params=pltpu.CompilerParams(
            dimension_semantics=("parallel",),      # shard batch tiles across TCs (v7x)
            vmem_limit_bytes=32 << 20,              # tiny footprint; explicit for v5e default
        ),
    )(x2, w1_p, b1_p, g_p, be_p, w2_p, b2_p)

    return z


def init_params(key, dim, hidden_dim):
    sizes = mlp_layer_sizes(dim, hidden_dim, nlayers=2, midmult=1.0)  # [dim, mid, hidden]
    d_in, d_mid, d_out = int(sizes[0]), int(sizes[1]), int(sizes[2])
    k1, k2, k3, k4 = jax.random.split(key, 4)
    # PyTorch-default-style uniform(-1/sqrt(fan_in), 1/sqrt(fan_in)), deterministic.
    lim1 = 1.0 / np.sqrt(d_in)
    lim2 = 1.0 / np.sqrt(d_mid)
    w1 = jax.random.uniform(k1, (d_in, d_mid), jnp.float32, -lim1, lim1)
    b1 = jax.random.uniform(k2, (1, d_mid), jnp.float32, -lim1, lim1)
    gamma = jnp.ones((1, d_mid), jnp.float32)
    beta = jnp.zeros((1, d_mid), jnp.float32)
    w2 = jax.random.uniform(k3, (d_mid, d_out), jnp.float32, -lim2, lim2)
    b2 = jax.random.uniform(k4, (1, d_out), jnp.float32, -lim2, lim2)
    return (w1, b1, gamma, beta, w2, b2)


def reference_forward(x, params, n_agents):
    """Pure-JAX f32 reference matching the PyTorch module semantics."""
    w1, b1, gamma, beta, w2, b2 = params
    B = x.shape[0] // n_agents
    h = x.reshape(B, -1) @ w1 + b1
    mu = jnp.mean(h, axis=-1, keepdims=True)
    var = jnp.mean((h - mu) ** 2, axis=-1, keepdims=True)
    h = (h - mu) / jnp.sqrt(var + 1e-5) * gamma + beta
    h = h * jnp.tanh(jax.nn.softplus(h))
    return h @ w2 + b2


if __name__ == "__main__":
    # Small shapes: n_agents=4, per-agent feature dim=8 -> dim = 32, hidden_dim = 16.
    n_agents = 4
    per_agent_dim = 8
    dim = n_agents * per_agent_dim          # Encoder's input_dim (post-reshape width)
    hidden_dim = 16
    B = 2                                   # number of "sets"; x has B*n_agents rows

    key = jax.random.PRNGKey(0)
    kx, kp = jax.random.split(key)
    x = jax.random.normal(kx, (B * n_agents, per_agent_dim), jnp.float32)
    params = init_params(kp, dim, hidden_dim)
    padded_params, dims = prepare_padded_params(params)   # built once, reused per call

    z = encoder_forward(x, padded_params, dims, n_agents)
    z = jax.block_until_ready(z)
    assert z.shape == (B, hidden_dim)

    z_ref = reference_forward(x, params, n_agents)
    # bf16 MXU operands + approx reciprocal in Mish -> relaxed tolerance vs f32 ref.
    np.testing.assert_allclose(np.asarray(z), np.asarray(z_ref), rtol=3e-2, atol=3e-2)

    print("KERNEL_OK")
</pallas_src>

<mosaic_0001>
module attributes {stable_mosaic.version = 11 : i64} {
  func.func @encoder_kernel(%arg0: i32, %arg1: memref<8x32xf32, #tpu.memory_space<vmem>>, %arg2: memref<32x128xbf16, #tpu.memory_space<vmem>>, %arg3: memref<1x128xf32, #tpu.memory_space<vmem>>, %arg4: memref<1x128xf32, #tpu.memory_space<vmem>>, %arg5: memref<1x128xf32, #tpu.memory_space<vmem>>, %arg6: memref<128x16xbf16, #tpu.memory_space<vmem>>, %arg7: memref<1x16xf32, #tpu.memory_space<vmem>>, %arg8: memref<8x16xf32, #tpu.memory_space<vmem>>) attributes {dimension_semantics = [#tpu.dimension_semantics<parallel>], iteration_bounds = array<i64: 1>, scalar_prefetch = 0 : i64, scratch_operands = 0 : i64, tpu.core_type = #tpu.core_type<tc>, window_params = [{transform_indices = @transform_0, window_bounds = array<i64: 8, 32>}, {pipeline_mode = #tpu.pipeline_mode<synchronous>, transform_indices = @transform_1, window_bounds = array<i64: 32, 128>}, {pipeline_mode = #tpu.pipeline_mode<synchronous>, transform_indices = @transform_2, window_bounds = array<i64: 1, 128>}, {pipeline_mode = #tpu.pipeline_mode<synchronous>, transform_indices = @transform_3, window_bounds = array<i64: 1, 128>}, {pipeline_mode = #tpu.pipeline_mode<synchronous>, transform_indices = @transform_4, window_bounds = array<i64: 1, 128>}, {pipeline_mode = #tpu.pipeline_mode<synchronous>, transform_indices = @transform_5, window_bounds = array<i64: 128, 16>}, {pipeline_mode = #tpu.pipeline_mode<synchronous>, transform_indices = @transform_6, window_bounds = array<i64: 1, 16>}, {transform_indices = @transform_7, window_bounds = array<i64: 8, 16>}]} {
    %c0 = arith.constant 0 : index
    %c0_0 = arith.constant 0 : index
    %0 = vector.load %arg1[%c0, %c0_0] : memref<8x32xf32, #tpu.memory_space<vmem>>, vector<8x32xf32>
    %1 = arith.truncf %0 : vector<8x32xf32> to vector<8x32xbf16>
    %c0_1 = arith.constant 0 : index
    %c0_2 = arith.constant 0 : index
    %2 = vector.load %arg2[%c0_1, %c0_2] : memref<32x128xbf16, #tpu.memory_space<vmem>>, vector<32x128xbf16>
    %cst = arith.constant dense<0.000000e+00> : vector<8x128xf32>
    %3 = tpu.matmul %1, %2, %cst {dimension_numbers = #tpu.dot_dimension_numbers<[1], [0], [0], [1], [0, 0, 1, 1], [], []>} : vector<8x32xbf16>, vector<32x128xbf16>, vector<8x128xf32> -> vector<8x128xf32>
    %c0_3 = arith.constant 0 : index
    %c0_4 = arith.constant 0 : index
    %4 = vector.load %arg3[%c0_3, %c0_4] : memref<1x128xf32, #tpu.memory_space<vmem>>, vector<1x128xf32>
    %5 = vector.broadcast %4 : vector<1x128xf32> to vector<8x128xf32>
    %6 = arith.addf %3, %5 : vector<8x128xf32>
    %7 = tpu.iota {dimensions = array<i32: 1>} : vector<1x128xi32>
    %c24_i32 = arith.constant 24 : i32
    %8 = vector.broadcast %c24_i32 : i32 to vector<1x128xi32>
    %9 = arith.cmpi slt, %7, %8 : vector<1x128xi32>
    %10 = arith.extui %9 : vector<1x128xi1> to vector<1x128xi32>
    %11 = arith.sitofp %10 : vector<1x128xi32> to vector<1x128xf32>
    %cst_5 = arith.constant dense<0.000000e+00> : vector<8xf32>
    %12 = vector.multi_reduction <add>, %6, %cst_5 [1] : vector<8x128xf32> to vector<8xf32>
    %13 = vector.shape_cast %12 : vector<8xf32> to vector<8x1xf32>
    %cst_6 = arith.constant 0.0416666679 : f32
    %14 = vector.broadcast %cst_6 : f32 to vector<8x1xf32>
    %15 = arith.mulf %13, %14 : vector<8x1xf32>
    %16 = vector.broadcast %15 : vector<8x1xf32> to vector<8x128xf32>
    %17 = arith.subf %6, %16 : vector<8x128xf32>
    %18 = vector.broadcast %11 : vector<1x128xf32> to vector<8x128xf32>
    %19 = arith.mulf %17, %18 : vector<8x128xf32>
    %20 = arith.mulf %19, %19 : vector<8x128xf32>
    %cst_7 = arith.constant dense<0.000000e+00> : vector<8xf32>
    %21 = vector.multi_reduction <add>, %20, %cst_7 [1] : vector<8x128xf32> to vector<8xf32>
    %22 = vector.shape_cast %21 : vector<8xf32> to vector<8x1xf32>
    %cst_8 = arith.constant 0.0416666679 : f32
    %23 = vector.broadcast %cst_8 : f32 to vector<8x1xf32>
    %24 = arith.mulf %22, %23 : vector<8x1xf32>
    %25 = vector.broadcast %15 : vector<8x1xf32> to vector<8x128xf32>
    %26 = arith.subf %6, %25 : vector<8x128xf32>
    %cst_9 = arith.constant 9.99999974E-6 : f32
    %27 = vector.broadcast %cst_9 : f32 to vector<8x1xf32>
    %28 = arith.addf %24, %27 : vector<8x1xf32>
    %29 = math.rsqrt %28 : vector<8x1xf32>
    %30 = vector.broadcast %29 : vector<8x1xf32> to vector<8x128xf32>
    %31 = arith.mulf %26, %30 : vector<8x128xf32>
    %c0_10 = arith.constant 0 : index
    %c0_11 = arith.constant 0 : index
    %32 = vector.load %arg4[%c0_10, %c0_11] : memref<1x128xf32, #tpu.memory_space<vmem>>, vector<1x128xf32>
    %33 = vector.broadcast %32 : vector<1x128xf32> to vector<8x128xf32>
    %34 = arith.mulf %31, %33 : vector<8x128xf32>
    %c0_12 = arith.constant 0 : index
    %c0_13 = arith.constant 0 : index
    %35 = vector.load %arg5[%c0_12, %c0_13] : memref<1x128xf32, #tpu.memory_space<vmem>>, vector<1x128xf32>
    %36 = vector.broadcast %35 : vector<1x128xf32> to vector<8x128xf32>
    %37 = arith.addf %34, %36 : vector<8x128xf32>
    %cst_14 = arith.constant 2.000000e+01 : f32
    %38 = vector.broadcast %cst_14 : f32 to vector<8x128xf32>
    %39 = arith.minimumf %37, %38 : vector<8x128xf32>
    %40 = math.exp %39 : vector<8x128xf32>
    %cst_15 = arith.constant 1.000000e+00 : f32
    %41 = vector.broadcast %cst_15 : f32 to vector<8x128xf32>
    %42 = arith.addf %41, %40 : vector<8x128xf32>
    %cst_16 = arith.constant 2.000000e+00 : f32
    %43 = vector.broadcast %cst_16 : f32 to vector<8x128xf32>
    %44 = arith.addf %43, %40 : vector<8x128xf32>
    %45 = arith.mulf %40, %44 : vector<8x128xf32>
    %46 = arith.mulf %42, %42 : vector<8x128xf32>
    %cst_17 = arith.constant 1.000000e+00 : f32
    %47 = vector.broadcast %cst_17 : f32 to vector<8x128xf32>
    %48 = arith.addf %46, %47 : vector<8x128xf32>
    %49 = arith.mulf %37, %45 : vector<8x128xf32>
    %50 = tpu.reciprocal %48 {approx = true} : vector<8x128xf32> -> vector<8x128xf32>
    %51 = arith.mulf %49, %50 : vector<8x128xf32>
    %52 = arith.truncf %51 : vector<8x128xf32> to vector<8x128xbf16>
    %c0_18 = arith.constant 0 : index
    %c0_19 = arith.constant 0 : index
    %53 = vector.load %arg6[%c0_18, %c0_19] : memref<128x16xbf16, #tpu.memory_space<vmem>>, vector<128x16xbf16>
    %cst_20 = arith.constant dense<0.000000e+00> : vector<8x16xf32>
    %54 = tpu.matmul %52, %53, %cst_20 {dimension_numbers = #tpu.dot_dimension_numbers<[1], [0], [0], [1], [0, 0, 1, 1], [], []>} : vector<8x128xbf16>, vector<128x16xbf16>, vector<8x16xf32> -> vector<8x16xf32>
    %c0_21 = arith.constant 0 : index
    %c0_22 = arith.constant 0 : index
    %55 = vector.load %arg7[%c0_21, %c0_22] : memref<1x16xf32, #tpu.memory_space<vmem>>, vector<1x16xf32>
    %56 = vector.broadcast %55 : vector<1x16xf32> to vector<8x16xf32>
    %57 = arith.addf %54, %56 : vector<8x16xf32>
    %c0_23 = arith.constant 0 : index
    %c0_24 = arith.constant 0 : index
    %58 = vector.load %arg8[%c0_23, %c0_24] : memref<8x16xf32, #tpu.memory_space<vmem>>, vector<8x16xf32>
    tpu.vector_store %arg8[%c0_23, %c0_24], %57 {strides = array<i32>} : memref<8x16xf32, #tpu.memory_space<vmem>>, vector<8x16xf32>,
    return
  }
  func.func @transform_0(%arg0: i32) -> (i32, i32) {
    %c0_i32 = arith.constant 0 : i32
    %c0_i32_0 = arith.constant 0 : i32
    return %arg0, %c0_i32 : i32, i32
  }
  func.func @transform_1(%arg0: i32) -> (i32, i32) {
    %c0_i32 = arith.constant 0 : i32
    %c0_i32_0 = arith.constant 0 : i32
    %c0_i32_1 = arith.constant 0 : i32
    return %c0_i32, %c0_i32_0 : i32, i32
  }
  func.func @transform_2(%arg0: i32) -> (i32, i32) {
    %c0_i32 = arith.constant 0 : i32
    %c0_i32_0 = arith.constant 0 : i32
    %c0_i32_1 = arith.constant 0 : i32
    return %c0_i32, %c0_i32_0 : i32, i32
  }
  func.func @transform_3(%arg0: i32) -> (i32, i32) {
    %c0_i32 = arith.constant 0 : i32
    %c0_i32_0 = arith.constant 0 : i32
    %c0_i32_1 = arith.constant 0 : i32
    return %c0_i32, %c0_i32_0 : i32, i32
  }
  func.func @transform_4(%arg0: i32) -> (i32, i32) {
    %c0_i32 = arith.constant 0 : i32
    %c0_i32_0 = arith.constant 0 : i32
    %c0_i32_1 = arith.constant 0 : i32
    return %c0_i32, %c0_i32_0 : i32, i32
  }
  func.func @transform_5(%arg0: i32) -> (i32, i32) {
    %c0_i32 = arith.constant 0 : i32
    %c0_i32_0 = arith.constant 0 : i32
    %c0_i32_1 = arith.constant 0 : i32
    return %c0_i32, %c0_i32_0 : i32, i32
  }
  func.func @transform_6(%arg0: i32) -> (i32, i32) {
    %c0_i32 = arith.constant 0 : i32
    %c0_i32_0 = arith.constant 0 : i32
    %c0_i32_1 = arith.constant 0 : i32
    return %c0_i32, %c0_i32_0 : i32, i32
  }
  func.func @transform_7(%arg0: i32) -> (i32, i32) {
    %c0_i32 = arith.constant 0 : i32
    %c0_i32_0 = arith.constant 0 : i32
    return %arg0, %c0_i32 : i32, i32
  }
}

</mosaic_0001>

<llo_original>
// kernel: tpu_custom_call.1
$region0: #{tpu_custom_call.1}
  #allocation0 [shape = 'u32[]', space=smem, size = 0x4, offset = 0x4, fixed_abs, tag = 'smem constant byte address 0x4 - core index']
  #allocation1 [shape = 'u32[144,128]{1,0:T(1,128)}', space=vmem, size = 0x12000, scoped, tag = 'internal scratch']
  %s0 = inlined_call_operand.vmem [shape: f32[2,32], index: 0, kind: input, shape index: {}]
  %s1 = inlined_call_operand.vmem [shape: bf16[32,128], index: 1, kind: input, shape index: {}]
  %s2 = inlined_call_operand.vmem [shape: f32[1,128], index: 2, kind: input, shape index: {}]
  %s3 = inlined_call_operand.vmem [shape: f32[1,128], index: 3, kind: input, shape index: {}]
  %s4 = inlined_call_operand.vmem [shape: f32[1,128], index: 4, kind: input, shape index: {}]
  %s5 = inlined_call_operand.vmem [shape: bf16[128,16], index: 5, kind: input, shape index: {}]
  %s6 = inlined_call_operand.vmem [shape: f32[1,16], index: 6, kind: input, shape index: {}]
  %s7 = inlined_call_operand.hbm [shape: f32[2,16], index: 7, kind: output, shape index: {}]
  %s8 = sld [smem:[#allocation0]]
  $region38: #{tpu_custom_call.1} parent=0
    _
  %s10 = ssub.s32 1, %s8
  %s11 = scalar_select 0, %s10, %s8
  $region1: #{tpu_custom_call.1} parent=0
    #allocation2 [shape = 'u8[4096]{0}', space=vmem, size = 0x1000, scoped, tag = 'output window, operand 0, single buffered']
    #allocation3 [shape = 's32[1]{0}', space=sflag, size = 0x4, scoped, tag = 'scoped memory for tpu_custom_call.1']
    %12 = vsyncpa [#allocation3], 0
    // Predicated region
    $region2: #{tpu_custom_call.1} parent=1 // pred_check
      _
    $region3: #{tpu_custom_call.1} parent=1 // pred_check_branch
      %14 = sbr.rel (0) target = $region5
    $region4: #{tpu_custom_call.1} parent=1 // pred_region
      _
    $region5: #{tpu_custom_call.1} parent=1 // pred_fallthru
      _
    // Predicated region
    $region6: #{tpu_custom_call.1} parent=1 // pred_check
      _
    $region7: #{tpu_custom_call.1} parent=1 // pred_check_branch
      %16 = sbr.rel (0) target = $region9
    $region8: #{tpu_custom_call.1} parent=1 // pred_region
      _
    $region9: #{tpu_custom_call.1} parent=1 // pred_fallthru
      _
    // Predicated region
    $region10: #{tpu_custom_call.1} parent=1 // pred_check
      _
    $region11: #{tpu_custom_call.1} parent=1 // pred_check_branch
      %18 = sbr.rel (0) target = $region13
    $region12: #{tpu_custom_call.1} parent=1 // pred_region
      _
    $region13: #{tpu_custom_call.1} parent=1 // pred_fallthru
      _
    // Predicated region
    $region14: #{tpu_custom_call.1} parent=1 // pred_check
      _
    $region15: #{tpu_custom_call.1} parent=1 // pred_check_branch
      %20 = sbr.rel (0) target = $region17
    $region16: #{tpu_custom_call.1} parent=1 // pred_region
      _
    $region17: #{tpu_custom_call.1} parent=1 // pred_fallthru
      _
    // Predicated region
    $region18: #{tpu_custom_call.1} parent=1 // pred_check
      _
    $region19: #{tpu_custom_call.1} parent=1 // pred_check_branch
      %22 = sbr.rel (0) target = $region21
    $region20: #{tpu_custom_call.1} parent=1 // pred_region
      _
    $region21: #{tpu_custom_call.1} parent=1 // pred_fallthru
      _
    // Predicated region
    $region22: #{tpu_custom_call.1} parent=1 // pred_check
      _
    $region23: #{tpu_custom_call.1} parent=1 // pred_check_branch
      %24 = sbr.rel (0) target = $region25
    $region24: #{tpu_custom_call.1} parent=1 // pred_region
      _
    $region25: #{tpu_custom_call.1} parent=1 // pred_fallthru
      _
    // Predicated region
    $region26: #{tpu_custom_call.1} parent=1 // pred_check
      _
    $region27: #{tpu_custom_call.1} parent=1 // pred_check_branch
      %26 = sbr.rel (0) target = $region29
    $region28: #{tpu_custom_call.1} parent=1 // pred_region
      _
    $region29: #{tpu_custom_call.1} parent=1 // pred_fallthru
      _
    %v28 = vld [vmem:[%s0] sm:$0xff]
    %v29 = vpack.c.bf16 %v28, %v28
    %v30 = vld [vmem:[%s1] sm:$0xf]
    %v31 = vld [vmem:[%s1 + $0x4] sm:$0xf]
    %v32 = vld [vmem:[%s1 + $0x8] sm:$0xf]
    %v33 = vld [vmem:[%s1 + $0xc] sm:$0xf]
    %v34 = vld [vmem:[%s2] sm:$0x1]
    %v36 = vlaneseq
    %v37 = vshrl.u32 %v36, 7
    %v38 = vsub.s32 0, %v37
    %v39 = vrot.slane %v34, %v38
    %v45 = vunpack.c.l.b16 %v30
    %v46 = vunpack.c.l.b16 %v31
    %v47 = vunpack.c.l.b16 %v32
    %v48 = vunpack.c.l.b16 %v33
    %v49 = vpack.c.b16 %v46, %v45
    %v50 = vpack.c.b16 %v48, %v47
    %vm53 = vcmask 261120
    %v55 = vsel %vm53, %v29, 0
    %57 = vmatprep.subr.bf16.mxu0 0
    %58 = vmatpush1.bf16.msra.mxu0 0
    %59 = vmatprep.subr.bf16.mxu0 0
    %60 = vmatpush1.bf16.msra.mxu0 0
    %61 = vmatprep.subr.bf16.mxu0 0
    %62 = vmatpush1.bf16.msra.mxu0 0
    %63 = vmatprep.subr.bf16.mxu0 0
    %64 = vmatpush1.bf16.msra.mxu0 0
    %65 = vmatprep.subr.bf16.mxu0 0
    %66 = vmatpush1.bf16.msra.mxu0 0
    %67 = vmatprep.subr.bf16.mxu0 0
    %68 = vmatpush1.bf16.msra.mxu0 0
    %69 = vmatprep.subr.bf16.mxu0 0
    %70 = vmatpush1.bf16.msra.mxu0 %v50
    %71 = vmatprep.subr.bf16.mxu0 0
    %72 = vmatpush1.bf16.msra.mxu0 %v49
    %73 = vmatprep.subr.bf16.mxu0 0
    %74 = vmatpush2.bf16.msra.mxu0 0
    %75 = vmatprep.subr.bf16.mxu0 0
    %76 = vmatpush2.bf16.msra.mxu0 0
    %77 = vmatprep.subr.bf16.mxu0 0
    %78 = vmatpush2.bf16.msra.mxu0 0
    %79 = vmatprep.subr.bf16.mxu0 0
    %80 = vmatpush2.bf16.msra.mxu0 0
    %81 = vmatprep.subr.bf16.mxu0 0
    %82 = vmatpush2.bf16.msra.mxu0 0
    %83 = vmatprep.subr.bf16.mxu0 0
    %84 = vmatpush2.bf16.msra.mxu0 0
    %85 = vmatprep.subr.bf16.mxu0 0
    %86 = vmatpush2.bf16.msra.mxu0 0
    %87 = vmatprep.subr.bf16.mxu0 0
    %88 = vmatpush2.bf16.msra.mxu0 0
    %89 = vmatprep.mubr.bf16.mxu0 0
    %90 = vmatmul.mubr.bf16.gmra.mxu0 %v55
    %v91 = vpop.f32.mrf.mxu0
    %v92 = vadd.f32 %v39, %v91
    %v93 = vpop.f32.mrf.mxu0
    %v94 = vpop.f32.mrf.mxu0
    %v95 = vpop.f32.mrf.mxu0
    %96 = vdwg.mxu0
    %v97 = vlaneseq
    %v98 = vand.u32 %v97, 127
    %vm99 = vcmp.lt.s32.totalorder %v98, 24
    %v100 = vsel %vm99, 1, 0
    %v101 = vcvt.s32.f32 %v100
    %102 = vadd.xlane.f32.xlu0 %v92
    %v103 = vpop.xlane.xlu0 %102
    %v104 = vmul.f32 %v103, 0.041666668
    %v105 = vsub.f32 %v92, %v104
    %v106 = vmul.f32 %v105, %v101
    %v107 = vmul.f32 %v106, %v106
    %108 = vadd.xlane.f32.xlu0 %v107
    %v109 = vpop.xlane.xlu0 %108
    %v110 = vmul.f32 %v109, 0.041666668
    %v111 = vadd.f32 %v110, 1e-05
    %v112 = vrsqrt.pop %v111
    %v113 = vmul.f32 %v105, %v112
    %v114 = vld [vmem:[%s3] sm:$0x1]
    %v116 = vlaneseq
    %v117 = vshrl.u32 %v116, 7
    %v118 = vsub.s32 0, %v117
    %v119 = vrot.slane %v114, %v118
    %v121 = vmul.f32 %v113, %v119
    %v122 = vld [vmem:[%s4] sm:$0x1]
    %v124 = vlaneseq
    %v125 = vshrl.u32 %v124, 7
    %v126 = vsub.s32 0, %v125
    %v127 = vrot.slane %v122, %v126
    %v129 = vadd.f32 %v121, %v127
    %v130 = vmin.f32 %v129, 20.0
    %v131 = vmul.f32 %v130, 1.442695
    %v132 = vpow.pop %v131
    %v133 = vadd.f32 %v132, 1.0
    %v134 = vadd.f32 %v132, 2.0
    %v135 = vmul.f32 %v132, %v134
    %v136 = vmul.f32 %v133, %v133
    %v137 = vadd.f32 %v136, 1.0
    %v138 = vmul.f32 %v129, %v135
    %v139 = vrcp.pop %v137
    %v140 = vmul.f32 %v138, %v139
    %v141 = vpack.c.bf16 %v140, %v140
    %v142 = vld [vmem:[%s5] sm:$0xf]
    %v143 = vld [vmem:[%s5 + $0x4] sm:$0xf]
    %v144 = vld [vmem:[%s5 + $0x8] sm:$0xf]
    %v145 = vld [vmem:[%s5 + $0xc] sm:$0xf]
    %v146 = vld [vmem:[%s5 + $0x10] sm:$0xf]
    %v147 = vld [vmem:[%s5 + $0x14] sm:$0xf]
    %v148 = vld [vmem:[%s5 + $0x18] sm:$0xf]
    %v149 = vld [vmem:[%s5 + $0x1c] sm:$0xf]
    %v150 = vld [vmem:[%s5 + $0x20] sm:$0xf]
    %v151 = vld [vmem:[%s5 + $0x24] sm:$0xf]
    %v152 = vld [vmem:[%s5 + $0x28] sm:$0xf]
    %v153 = vld [vmem:[%s5 + $0x2c] sm:$0xf]
    %v154 = vld [vmem:[%s5 + $0x30] sm:$0xf]
    %v155 = vld [vmem:[%s5 + $0x34] sm:$0xf]
    %v156 = vld [vmem:[%s5 + $0x38] sm:$0xf]
    %v157 = vld [vmem:[%s5 + $0x3c] sm:$0xf]
    %v158 = vld [vmem:[%s6] sm:$0x1]
    %v160 = vlaneseq
    %v161 = vshrl.u32 %v160, 7
    %v162 = vsub.s32 0, %v161
    %v163 = vrot.slane %v158, %v162
    %v181 = vunpack.c.l.b16 %v142
    %v182 = vunpack.c.l.b16 %v143
    %v183 = vunpack.c.l.b16 %v144
    %v184 = vunpack.c.l.b16 %v145
    %v185 = vunpack.c.l.b16 %v146
    %v186 = vunpack.c.l.b16 %v147
    %v187 = vunpack.c.l.b16 %v148
    %v188 = vunpack.c.l.b16 %v149
    %v189 = vunpack.c.l.b16 %v150
    %v190 = vunpack.c.l.b16 %v151
    %v191 = vunpack.c.l.b16 %v152
    %v192 = vunpack.c.l.b16 %v153
    %v193 = vunpack.c.l.b16 %v154
    %v194 = vunpack.c.l.b16 %v155
    %v195 = vunpack.c.l.b16 %v156
    %v196 = vunpack.c.l.b16 %v157
    %v197 = vpack.c.b16 %v182, %v181
    %v198 = vpack.c.b16 %v184, %v183
    %v199 = vpack.c.b16 %v186, %v185
    %v200 = vpack.c.b16 %v188, %v187
    %v201 = vpack.c.b16 %v190, %v189
    %v202 = vpack.c.b16 %v192, %v191
    %v203 = vpack.c.b16 %v194, %v193
    %v204 = vpack.c.b16 %v196, %v195
    %213 = vmatprep.subr.bf16.mxu0 0
    %214 = vmatpush1.bf16.msra.mxu0 %v204
    %215 = vmatprep.subr.bf16.mxu0 0
    %216 = vmatpush1.bf16.msra.mxu0 %v203
    %217 = vmatprep.subr.bf16.mxu0 0
    %218 = vmatpush1.bf16.msra.mxu0 %v202
    %219 = vmatprep.subr.bf16.mxu0 0
    %220 = vmatpush1.bf16.msra.mxu0 %v201
    %221 = vmatprep.subr.bf16.mxu0 0
    %222 = vmatpush1.bf16.msra.mxu0 %v200
    %223 = vmatprep.subr.bf16.mxu0 0
    %224 = vmatpush1.bf16.msra.mxu0 %v199
    %225 = vmatprep.subr.bf16.mxu0 0
    %226 = vmatpush1.bf16.msra.mxu0 %v198
    %227 = vmatprep.subr.bf16.mxu0 0
    %228 = vmatpush1.bf16.msra.mxu0 %v197
    %229 = vmatprep.subr.bf16.mxu0 0
    %230 = vmatpush2.bf16.msra.mxu0 0
    %231 = vmatprep.subr.bf16.mxu0 0
    %232 = vmatpush2.bf16.msra.mxu0 0
    %233 = vmatprep.subr.bf16.mxu0 0
    %234 = vmatpush2.bf16.msra.mxu0 0
    %235 = vmatprep.subr.bf16.mxu0 0
    %236 = vmatpush2.bf16.msra.mxu0 0
    %237 = vmatprep.subr.bf16.mxu0 0
    %238 = vmatpush2.bf16.msra.mxu0 0
    %239 = vmatprep.subr.bf16.mxu0 0
    %240 = vmatpush2.bf16.msra.mxu0 0
    %241 = vmatprep.subr.bf16.mxu0 0
    %242 = vmatpush2.bf16.msra.mxu0 0
    %243 = vmatprep.subr.bf16.mxu0 0
    %244 = vmatpush2.bf16.msra.mxu0 0
    %245 = vmatprep.mubr.bf16.mxu0 0
    %246 = vmatmul.mubr.bf16.gmra.mxu0 %v141
    %v247 = vpop.f32.mrf.mxu0
    %v248 = vadd.f32 %v163, %v247
    %v249 = vpop.f32.mrf.mxu0
    %v250 = vpop.f32.mrf.mxu0
    %v251 = vpop.f32.mrf.mxu0
    %252 = vdwg.mxu0
    %vm253 = vcmask 130048
    %254 = vst.msk [vmem:[#allocation2] sm:$0xff] %vm253, %v248
    // Predicated region
    $region30: #{tpu_custom_call.1} parent=1 // pred_check
      _
    $region31: #{tpu_custom_call.1} parent=1 // pred_check_branch
      %256 = sbr.rel (0) target = $region33
    $region32: #{tpu_custom_call.1} parent=1 // pred_region
      %s258 = ssub.s32 128, 32
      %259 = vsyncadd [#allocation3], %s258
      %s260 = sshll.u32 [#allocation2], 4
      %s261 = int_to_ptr.vmem [resolvable:$true] %s260
      %266 = dma.vmem_to_hbm [thread:$0]  %s261, 32, %s7, [#allocation3], 32, 32, 2
    $region33: #{tpu_custom_call.1} parent=1 // pred_fallthru
      _
    // Predicated region
    $region34: #{tpu_custom_call.1} parent=1 // pred_check
      _
    $region35: #{tpu_custom_call.1} parent=1 // pred_check_branch
      %268 = sbr.rel (0) target = $region37
    $region36: #{tpu_custom_call.1} parent=1 // pred_region
      %269 = dma.done [#allocation3], 128
    $region37: #{tpu_custom_call.1} parent=1 // pred_fallthru
      _
    %270 = vsyncpa [#allocation3], 1

</llo_original>
